<compile_context>
chip_gen: v7x
topology: tpu7x:2x2x1
jax: 0.10.0
libtpu: 0.0.40
codegen_flags: <defaults>
</compile_context>

<pallas_src>
import jax
import jax.numpy as jnp
import numpy as np
from jax.experimental import pallas as pl
from jax.experimental.pallas import tpu as pltpu


# ---------------------------------------------------------------------------
# shared in-kernel body: reflect-padded 3x3 dynamic low-pass accumulation
# ---------------------------------------------------------------------------
def _tap_accumulate(x, wgt, msk, H, W):
    """x:   (Ct, H*W) f32  channels on sublanes, flattened spatial on lanes
       wgt: (Ct, 9)   f32  per-channel tap weights (softmax over the 9 taps)
       msk: (4, H*W)  f32  boundary flags [w==0, w==W-1, h==0, h==H-1]
       returns low = sum_k wgt[:, k] * patch_k, shape (Ct, H*W), f32."""
    HW = H * W

    def rot(a, s):
        # out[:, p] = a[:, (p - s) % HW]  -- cyclic lane rotation on the XLU
        s = s % HW
        if s == 0:
            return a
        return pltpu.roll(a, s, 1)

    def bmask(row):
        # (1, HW) f32 flag -> full-shape bool mask (sublane broadcast + compare)
        return jnp.broadcast_to(row, x.shape) > 0.5

    m_w0, m_w1 = bmask(msk[0:1, :]), bmask(msk[1:2, :])
    m_h0, m_h1 = bmask(msk[2:3, :]), bmask(msk[3:4, :])

    x_nxt = rot(x, -1)    # x[:, p + 1]
    x_prv = rot(x, 1)     # x[:, p - 1]
    # column (dw) shifts with reflection at w == 0 / w == W-1, built once, reused 3x
    w_shifted = (
        jnp.where(m_w0, x_nxt, x_prv),   # dw = -1 (reflect at w == 0)
        x,                               # dw =  0
        jnp.where(m_w1, x_prv, x_nxt),   # dw = +1 (reflect at w == W-1)
    )

    acc = None
    for j, y in enumerate(w_shifted):                 # j -> kw = dw + 1
        y_up = rot(y, W)      # y[:, p - W]  (row above)
        y_dn = rot(y, -W)     # y[:, p + W]  (row below)
        h_shifted = (
            jnp.where(m_h0, y_dn, y_up),   # dh = -1 (reflect at h == 0)
            y,                             # dh =  0
            jnp.where(m_h1, y_up, y_dn),   # dh = +1 (reflect at h == H-1)
        )
        for i, patch in enumerate(h_shifted):         # i -> kh = dh + 1
            k = i * 3 + j                             # F.unfold tap order
            # (Ct,HW) * (Ct,1) lane-broadcast FMA; lane-slice of the tiny (Ct,9)
            # weight table is negligible next to the full-array FMA.
            term = patch * wgt[:, k:k + 1]
            acc = term if acc is None else acc + term
    return acc


# ---------------------------------------------------------------------------
# kernel A: single pass (pooling + gating + accumulation fused)
# ---------------------------------------------------------------------------
def _make_fullimage_kernel(H, W, G, KK):
    HW = H * W
    inv_hw = 1.0 / float(HW)

    def kernel(x_ref, wt_ref, b_ref, onehot_ref, msk_ref, low_ref, high_ref):
        # x_ref:      (1, C, HW)   current batch element
        # wt_ref:     (C, G*KK)    fused (1x1 conv o eval-BN) weight, lane j = g*KK + k
        # b_ref:      (1, G*KK)    fused bias
        # onehot_ref: (C, G)       group -> channel expansion (one-hot)
        # msk_ref:    (4, HW)      boundary flags
        x = x_ref[0].astype(jnp.float32)                               # (C, HW)

        # AdaptiveAvgPool2d((1,1)): per-channel spatial mean (single lane reduce)
        pooled = jnp.sum(x, axis=1, keepdims=True) * inv_hw            # (C, 1)

        # fused gating: all logits in one broadcast-mul + one sublane reduce,
        # one exp for all groups (per-group softmax is shift-invariant, so one
        # global max stabilises every group).
        logits = (jnp.sum(wt_ref[...] * pooled, axis=0, keepdims=True)
                  + b_ref[...])                                        # (1, G*KK)
        e = jnp.exp(logits - jnp.max(logits, axis=-1, keepdims=True))  # (1, G*KK)

        # tiny per-group denominator + one-hot expansion (all (1,KK)/(C,1) ops)
        onehot = onehot_ref[...]                                       # (C, G)
        wgt = None
        for g in range(G):
            e_g = e[:, g * KK:(g + 1) * KK]                            # (1, KK)
            inv = pl.reciprocal(jnp.sum(e_g, axis=-1, keepdims=True), approx=False)
            term = onehot[:, g:g + 1] * (e_g * inv)                    # (C, KK)
            wgt = term if wgt is None else wgt + term

        low = _tap_accumulate(x, wgt, msk_ref[...], H, W)              # (C, HW) f32
        low_ref[0] = low.astype(low_ref.dtype)
        high_ref[0] = (x - low).astype(high_ref.dtype)

    return kernel


# ---------------------------------------------------------------------------
# kernel B: channel-tiled accumulation (gating precomputed in XLA pre-pass)
# ---------------------------------------------------------------------------
def _make_channel_tiled_kernel(H, W):
    def kernel(x_ref, wgt_ref, msk_ref, low_ref, high_ref):
        # x_ref: (1, TC, HW), wgt_ref: (1, TC, KK) per-channel tap weights, msk_ref: (4, HW)
        x = x_ref[0].astype(jnp.float32)
        wgt = wgt_ref[0].astype(jnp.float32)
        low = _tap_accumulate(x, wgt, msk_ref[...], H, W)
        low_ref[0] = low.astype(low_ref.dtype)
        high_ref[0] = (x - low).astype(high_ref.dtype)
    return kernel


# ---------------------------------------------------------------------------
# wrapper
# ---------------------------------------------------------------------------
def _vmem_capacity_bytes():
    try:
        info = pltpu.get_tpu_info()
        cap = getattr(info, "vmem_capacity_bytes", None)
        if cap:
            return int(cap)
    except Exception:
        pass
    return 128 * 1024 * 1024   # conservative v5e/v6e default if query fails


def _clamp_vmem_limit(est, cap):
    return int(min(max(est + (8 << 20), 32 << 20), int(0.9 * cap)))


def dynamic_decoupler(x_nchw, conv_w, bn_gamma, bn_beta, bn_mean, bn_var,
                      kernel_size=3, group=8, eps=1e-5, channel_tile=None):
    """DynamicDecoupler forward (eval-mode BN). Returns (low_part, out_high), NCHW.

    channel_tile=None -> auto: single-pass kernel when it fits VMEM, else two-pass
                         channel-tiled kernel.
    channel_tile=int  -> force the two-pass channel-tiled kernel with that tile
                         (use on v7x for small-batch inference to feed both TCs).
    """
    N, C, H, W = x_nchw.shape
    KS, G = kernel_size, group
    KK = KS * KS
    assert KS == 3, "Pallas kernel implements the module default kernel_size=3"
    assert C % G == 0, "in_channels must be divisible by group"
    assert H >= 2 and W >= 2, "reflection padding of 1 needs spatial dims >= 2"
    Cg = C // G
    HW = H * W

    # fold eval-mode BatchNorm into the 1x1 conv
    scale = bn_gamma / jnp.sqrt(bn_var + eps)                       # (G*KK,)
    fused_w = conv_w.astype(jnp.float32) * scale[:, None]           # (G*KK, C)
    fused_b = (bn_beta - bn_mean * scale).astype(jnp.float32)       # (G*KK,)

    # boundary flags on the flattened spatial axis: [w==0, w==W-1, h==0, h==H-1]
    pos = np.arange(HW)
    col, row = pos % W, pos // W
    masks = jnp.asarray(np.stack([col == 0, col == W - 1,
                                  row == 0, row == H - 1]).astype(np.float32))   # (4, HW)

    # free row-major reshape: lane axis = H*W; no NCHW<->NHWC transpose in HBM
    x_flat = x_nchw.reshape(N, C, HW)
    itemsize = x_flat.dtype.itemsize
    vmem_cap = _vmem_capacity_bytes()

    def working_set(ct):
        io = 2 * 3 * ct * HW * itemsize      # double-buffered x/low/high blocks
        tmp = 14 * ct * HW * 4               # live in-kernel f32 temporaries (shifts/selects/acc)
        return io + tmp

    budget = int(0.40 * vmem_cap)

    if channel_tile is None:
        use_tiled = working_set(C) > budget
        if use_tiled:
            cands = [c for c in range(C, 0, -1) if C % c == 0 and (c % 8 == 0 or c == C)]
            tc = next((c for c in cands if working_set(c) <= budget), cands[-1])
        else:
            tc = C
    else:
        use_tiled = True
        tc = int(channel_tile)
        assert C % tc == 0 and (tc % 8 == 0 or tc == C), \
            "channel_tile must divide C and be sublane aligned"

    out_shape = (jax.ShapeDtypeStruct((N, C, HW), x_flat.dtype),
                 jax.ShapeDtypeStruct((N, C, HW), x_flat.dtype))

    if not use_tiled:
        # ---- single pass: 1 HBM read + 2 writes of x per batch element ----
        wt_cm = jnp.transpose(fused_w).astype(jnp.float32)          # (C, G*KK)
        b2 = fused_b.reshape(1, G * KK)
        onehot = (jnp.arange(C)[:, None] // Cg ==
                  jnp.arange(G)[None, :]).astype(jnp.float32)       # (C, G)

        param_bytes = (C * G * KK + G * KK + C * G + 4 * HW) * 4
        vmem_limit = _clamp_vmem_limit(working_set(C) + 2 * param_bytes, vmem_cap)

        kernel = _make_fullimage_kernel(H, W, G, KK)
        low, high = pl.pallas_call(
            kernel,
            out_shape=out_shape,
            grid_spec=pltpu.PrefetchScalarGridSpec(
                num_scalar_prefetch=0,
                grid=(N,),
                in_specs=[
                    pl.BlockSpec((1, C, HW), lambda n: (n, 0, 0)),
                    pl.BlockSpec((C, G * KK), lambda n: (0, 0)),
                    pl.BlockSpec((1, G * KK), lambda n: (0, 0)),
                    pl.BlockSpec((C, G), lambda n: (0, 0)),
                    pl.BlockSpec((4, HW), lambda n: (0, 0)),
                ],
                out_specs=[
                    pl.BlockSpec((1, C, HW), lambda n: (n, 0, 0)),
                    pl.BlockSpec((1, C, HW), lambda n: (n, 0, 0)),
                ],
            ),
            compiler_params=pltpu.CompilerParams(
                dimension_semantics=("parallel",),
                vmem_limit_bytes=vmem_limit,
            ),
        )(x_flat, wt_cm, b2, onehot, masks)
    else:
        # ---- two-pass: XLA gating pre-pass, then channel-tiled accumulation ----
        pooled = jnp.mean(x_nchw.astype(jnp.float32), axis=(2, 3))                  # (N, C)
        logits = jnp.dot(pooled, fused_w.T,
                         precision=jax.lax.Precision.HIGHEST) + fused_b             # (N, G*KK)
        sm = jax.nn.softmax(logits.reshape(N, G, KK), axis=-1)                      # (N, G, KK)
        wgt_full = jnp.repeat(sm, Cg, axis=1)                                       # (N, C, KK)

        param_bytes = (4 * HW + 2 * tc * KK) * 4
        vmem_limit = _clamp_vmem_limit(working_set(tc) + 2 * param_bytes, vmem_cap)

        kernel = _make_channel_tiled_kernel(H, W)
        low, high = pl.pallas_call(
            kernel,
            out_shape=out_shape,
            grid_spec=pltpu.PrefetchScalarGridSpec(
                num_scalar_prefetch=0,
                grid=(N, C // tc),
                in_specs=[
                    pl.BlockSpec((1, tc, HW), lambda n, c: (n, c, 0)),
                    pl.BlockSpec((1, tc, KK), lambda n, c: (n, c, 0)),
                    pl.BlockSpec((4, HW), lambda n, c: (0, 0)),
                ],
                out_specs=[
                    pl.BlockSpec((1, tc, HW), lambda n, c: (n, c, 0)),
                    pl.BlockSpec((1, tc, HW), lambda n, c: (n, c, 0)),
                ],
            ),
            compiler_params=pltpu.CompilerParams(
                dimension_semantics=("parallel", "parallel"),
                vmem_limit_bytes=vmem_limit,
            ),
        )(x_flat, wgt_full, masks)

    return low.reshape(N, C, H, W), high.reshape(N, C, H, W)


# ---------------------------------------------------------------------------
# pure-JAX reference (mirrors the PyTorch forward, eval-mode BN)
# ---------------------------------------------------------------------------
def _reference(x_nchw, conv_w, bn_gamma, bn_beta, bn_mean, bn_var,
               kernel_size=3, group=8, eps=1e-5):
    N, C, H, W = x_nchw.shape
    KS, G = kernel_size, group
    KK = KS * KS
    Cg = C // G
    pad = KS // 2

    pooled = jnp.mean(x_nchw, axis=(2, 3))                                  # (N, C)
    lf = jnp.dot(pooled, conv_w.T, precision=jax.lax.Precision.HIGHEST)     # (N, G*KK)
    lf = (lf - bn_mean) / jnp.sqrt(bn_var + eps) * bn_gamma + bn_beta
    filt = jax.nn.softmax(lf.reshape(N, G, KK), axis=-1)                    # (N, G, KK)

    xpad = jnp.pad(x_nchw, ((0, 0), (0, 0), (pad, pad), (pad, pad)), mode="reflect")
    low = jnp.zeros_like(x_nchw)
    for k in range(KK):
        dh, dw = divmod(k, KS)
        patch = xpad[:, :, dh:dh + H, dw:dw + W]                            # (N, C, H, W)
        wk_c = jnp.repeat(filt[:, :, k], Cg, axis=1)                        # (N, C)
        low = low + patch * wk_c[:, :, None, None]
    return low, x_nchw - low


if __name__ == "__main__":
    key = jax.random.PRNGKey(0)
    k_x, k_w, k_g, k_b, k_m, k_v = jax.random.split(key, 6)

    N, C, H, W = 2, 16, 16, 16
    G, KS = 8, 3
    KK = KS * KS

    x = jax.random.normal(k_x, (N, C, H, W), dtype=jnp.float32)

    # conv weight (G*KK, C) ~ kaiming_normal_(mode='fan_out', relu gain)
    fan_out = G * KK
    conv_w = jnp.sqrt(2.0 / fan_out) * jax.random.normal(k_w, (G * KK, C), dtype=jnp.float32)

    # BatchNorm2d(G*KK) eval-mode parameters (non-trivial, to exercise the BN fold)
    bn_gamma = 1.0 + 0.1 * jax.random.normal(k_g, (G * KK,), jnp.float32)
    bn_beta = 0.1 * jax.random.normal(k_b, (G * KK,), jnp.float32)
    bn_mean = 0.05 * jax.random.normal(k_m, (G * KK,), jnp.float32)
    bn_var = jnp.abs(1.0 + 0.1 * jax.random.normal(k_v, (G * KK,), jnp.float32))

    low_ref, high_ref = _reference(x, conv_w, bn_gamma, bn_beta, bn_mean, bn_var,
                                   kernel_size=KS, group=G)

    # path A: single-pass fused kernel (auto-selected at these shapes)
    low, high = dynamic_decoupler(x, conv_w, bn_gamma, bn_beta, bn_mean, bn_var,
                                  kernel_size=KS, group=G)
    jax.block_until_ready((low, high))
    np.testing.assert_allclose(np.asarray(low), np.asarray(low_ref), rtol=1e-4, atol=1e-4)
    np.testing.assert_allclose(np.asarray(high), np.asarray(high_ref), rtol=1e-4, atol=1e-4)

    # path B: forced two-pass channel-tiled kernel (v7x-style, 2 parallel grid axes)
    low2, high2 = dynamic_decoupler(x, conv_w, bn_gamma, bn_beta, bn_mean, bn_var,
                                    kernel_size=KS, group=G, channel_tile=8)
    jax.block_until_ready((low2, high2))
    np.testing.assert_allclose(np.asarray(low2), np.asarray(low_ref), rtol=1e-4, atol=1e-4)
    np.testing.assert_allclose(np.asarray(high2), np.asarray(high_ref), rtol=1e-4, atol=1e-4)

    print("KERNEL_OK")
</pallas_src>

<mosaic_0001>
module attributes {stable_mosaic.version = 11 : i64} {
  func.func @kernel(%arg0: i32, %arg1: memref<1x16x256xf32, #tpu.memory_space<vmem>>, %arg2: memref<16x72xf32, #tpu.memory_space<vmem>>, %arg3: memref<1x72xf32, #tpu.memory_space<vmem>>, %arg4: memref<16x8xf32, #tpu.memory_space<vmem>>, %arg5: memref<4x256xf32, #tpu.memory_space<vmem>>, %arg6: memref<1x16x256xf32, #tpu.memory_space<vmem>>, %arg7: memref<1x16x256xf32, #tpu.memory_space<vmem>>) attributes {dimension_semantics = [#tpu.dimension_semantics<parallel>], iteration_bounds = array<i64: 2>, scalar_prefetch = 0 : i64, scratch_operands = 0 : i64, tpu.core_type = #tpu.core_type<tc>, window_params = [{transform_indices = @transform_0, window_bounds = array<i64: 1, 16, 256>}, {pipeline_mode = #tpu.pipeline_mode<synchronous>, transform_indices = @transform_1, window_bounds = array<i64: 16, 72>}, {pipeline_mode = #tpu.pipeline_mode<synchronous>, transform_indices = @transform_2, window_bounds = array<i64: 1, 72>}, {pipeline_mode = #tpu.pipeline_mode<synchronous>, transform_indices = @transform_3, window_bounds = array<i64: 16, 8>}, {pipeline_mode = #tpu.pipeline_mode<synchronous>, transform_indices = @transform_4, window_bounds = array<i64: 4, 256>}, {transform_indices = @transform_5, window_bounds = array<i64: 1, 16, 256>}, {transform_indices = @transform_6, window_bounds = array<i64: 1, 16, 256>}]} {
    %c0 = arith.constant 0 : index
    %c0_0 = arith.constant 0 : index
    %c0_1 = arith.constant 0 : index
    %0 = vector.load %arg1[%c0, %c0_0, %c0_1] : memref<1x16x256xf32, #tpu.memory_space<vmem>>, vector<1x16x256xf32>
    %1 = vector.shape_cast %0 : vector<1x16x256xf32> to vector<16x256xf32>
    %cst = arith.constant dense<0.000000e+00> : vector<16xf32>
    %2 = vector.multi_reduction <add>, %1, %cst [1] : vector<16x256xf32> to vector<16xf32>
    %3 = vector.shape_cast %2 : vector<16xf32> to vector<16x1xf32>
    %cst_2 = arith.constant 3.906250e-03 : f32
    %4 = vector.broadcast %cst_2 : f32 to vector<16x1xf32>
    %5 = arith.mulf %3, %4 : vector<16x1xf32>
    %c0_3 = arith.constant 0 : index
    %c0_4 = arith.constant 0 : index
    %6 = vector.load %arg2[%c0_3, %c0_4] : memref<16x72xf32, #tpu.memory_space<vmem>>, vector<16x72xf32>
    %7 = vector.broadcast %5 : vector<16x1xf32> to vector<16x72xf32>
    %8 = arith.mulf %6, %7 : vector<16x72xf32>
    %cst_5 = arith.constant dense<0.000000e+00> : vector<72xf32>
    %9 = vector.multi_reduction <add>, %8, %cst_5 [0] : vector<16x72xf32> to vector<72xf32>
    %10 = vector.shape_cast %9 : vector<72xf32> to vector<1x72xf32>
    %c0_6 = arith.constant 0 : index
    %c0_7 = arith.constant 0 : index
    %11 = vector.load %arg3[%c0_6, %c0_7] : memref<1x72xf32, #tpu.memory_space<vmem>>, vector<1x72xf32>
    %12 = arith.addf %10, %11 : vector<1x72xf32>
    %cst_8 = arith.constant dense<0xFF800000> : vector<1xf32>
    %13 = vector.multi_reduction <maximumf>, %12, %cst_8 [1] : vector<1x72xf32> to vector<1xf32>
    %14 = vector.shape_cast %13 : vector<1xf32> to vector<1x1xf32>
    %15 = vector.broadcast %14 : vector<1x1xf32> to vector<1x72xf32>
    %16 = arith.subf %12, %15 : vector<1x72xf32>
    %17 = math.exp %16 : vector<1x72xf32>
    %c0_9 = arith.constant 0 : index
    %c0_10 = arith.constant 0 : index
    %18 = vector.load %arg4[%c0_9, %c0_10] : memref<16x8xf32, #tpu.memory_space<vmem>>, vector<16x8xf32>
    %19 = vector.extract_strided_slice %17 {offsets = [0, 0], sizes = [1, 9], strides = [1, 1]} : vector<1x72xf32> to vector<1x9xf32>
    %cst_11 = arith.constant dense<0.000000e+00> : vector<1xf32>
    %20 = vector.multi_reduction <add>, %19, %cst_11 [1] : vector<1x9xf32> to vector<1xf32>
    %21 = vector.shape_cast %20 : vector<1xf32> to vector<1x1xf32>
    %22 = tpu.reciprocal %21 : vector<1x1xf32> -> vector<1x1xf32>
    %23 = vector.extract_strided_slice %18 {offsets = [0, 0], sizes = [16, 1], strides = [1, 1]} : vector<16x8xf32> to vector<16x1xf32>
    %24 = vector.broadcast %22 : vector<1x1xf32> to vector<1x9xf32>
    %25 = arith.mulf %19, %24 : vector<1x9xf32>
    %26 = vector.broadcast %23 : vector<16x1xf32> to vector<16x9xf32>
    %27 = vector.broadcast %25 : vector<1x9xf32> to vector<16x9xf32>
    %28 = arith.mulf %26, %27 : vector<16x9xf32>
    %29 = vector.extract_strided_slice %17 {offsets = [0, 9], sizes = [1, 9], strides = [1, 1]} : vector<1x72xf32> to vector<1x9xf32>
    %cst_12 = arith.constant dense<0.000000e+00> : vector<1xf32>
    %30 = vector.multi_reduction <add>, %29, %cst_12 [1] : vector<1x9xf32> to vector<1xf32>
    %31 = vector.shape_cast %30 : vector<1xf32> to vector<1x1xf32>
    %32 = tpu.reciprocal %31 : vector<1x1xf32> -> vector<1x1xf32>
    %33 = vector.extract_strided_slice %18 {offsets = [0, 1], sizes = [16, 1], strides = [1, 1]} : vector<16x8xf32> to vector<16x1xf32>
    %34 = vector.broadcast %32 : vector<1x1xf32> to vector<1x9xf32>
    %35 = arith.mulf %29, %34 : vector<1x9xf32>
    %36 = vector.broadcast %33 : vector<16x1xf32> to vector<16x9xf32>
    %37 = vector.broadcast %35 : vector<1x9xf32> to vector<16x9xf32>
    %38 = arith.mulf %36, %37 : vector<16x9xf32>
    %39 = arith.addf %28, %38 : vector<16x9xf32>
    %40 = vector.extract_strided_slice %17 {offsets = [0, 18], sizes = [1, 9], strides = [1, 1]} : vector<1x72xf32> to vector<1x9xf32>
    %cst_13 = arith.constant dense<0.000000e+00> : vector<1xf32>
    %41 = vector.multi_reduction <add>, %40, %cst_13 [1] : vector<1x9xf32> to vector<1xf32>
    %42 = vector.shape_cast %41 : vector<1xf32> to vector<1x1xf32>
    %43 = tpu.reciprocal %42 : vector<1x1xf32> -> vector<1x1xf32>
    %44 = vector.extract_strided_slice %18 {offsets = [0, 2], sizes = [16, 1], strides = [1, 1]} : vector<16x8xf32> to vector<16x1xf32>
    %45 = vector.broadcast %43 : vector<1x1xf32> to vector<1x9xf32>
    %46 = arith.mulf %40, %45 : vector<1x9xf32>
    %47 = vector.broadcast %44 : vector<16x1xf32> to vector<16x9xf32>
    %48 = vector.broadcast %46 : vector<1x9xf32> to vector<16x9xf32>
    %49 = arith.mulf %47, %48 : vector<16x9xf32>
    %50 = arith.addf %39, %49 : vector<16x9xf32>
    %51 = vector.extract_strided_slice %17 {offsets = [0, 27], sizes = [1, 9], strides = [1, 1]} : vector<1x72xf32> to vector<1x9xf32>
    %cst_14 = arith.constant dense<0.000000e+00> : vector<1xf32>
    %52 = vector.multi_reduction <add>, %51, %cst_14 [1] : vector<1x9xf32> to vector<1xf32>
    %53 = vector.shape_cast %52 : vector<1xf32> to vector<1x1xf32>
    %54 = tpu.reciprocal %53 : vector<1x1xf32> -> vector<1x1xf32>
    %55 = vector.extract_strided_slice %18 {offsets = [0, 3], sizes = [16, 1], strides = [1, 1]} : vector<16x8xf32> to vector<16x1xf32>
    %56 = vector.broadcast %54 : vector<1x1xf32> to vector<1x9xf32>
    %57 = arith.mulf %51, %56 : vector<1x9xf32>
    %58 = vector.broadcast %55 : vector<16x1xf32> to vector<16x9xf32>
    %59 = vector.broadcast %57 : vector<1x9xf32> to vector<16x9xf32>
    %60 = arith.mulf %58, %59 : vector<16x9xf32>
    %61 = arith.addf %50, %60 : vector<16x9xf32>
    %62 = vector.extract_strided_slice %17 {offsets = [0, 36], sizes = [1, 9], strides = [1, 1]} : vector<1x72xf32> to vector<1x9xf32>
    %cst_15 = arith.constant dense<0.000000e+00> : vector<1xf32>
    %63 = vector.multi_reduction <add>, %62, %cst_15 [1] : vector<1x9xf32> to vector<1xf32>
    %64 = vector.shape_cast %63 : vector<1xf32> to vector<1x1xf32>
    %65 = tpu.reciprocal %64 : vector<1x1xf32> -> vector<1x1xf32>
    %66 = vector.extract_strided_slice %18 {offsets = [0, 4], sizes = [16, 1], strides = [1, 1]} : vector<16x8xf32> to vector<16x1xf32>
    %67 = vector.broadcast %65 : vector<1x1xf32> to vector<1x9xf32>
    %68 = arith.mulf %62, %67 : vector<1x9xf32>
    %69 = vector.broadcast %66 : vector<16x1xf32> to vector<16x9xf32>
    %70 = vector.broadcast %68 : vector<1x9xf32> to vector<16x9xf32>
    %71 = arith.mulf %69, %70 : vector<16x9xf32>
    %72 = arith.addf %61, %71 : vector<16x9xf32>
    %73 = vector.extract_strided_slice %17 {offsets = [0, 45], sizes = [1, 9], strides = [1, 1]} : vector<1x72xf32> to vector<1x9xf32>
    %cst_16 = arith.constant dense<0.000000e+00> : vector<1xf32>
    %74 = vector.multi_reduction <add>, %73, %cst_16 [1] : vector<1x9xf32> to vector<1xf32>
    %75 = vector.shape_cast %74 : vector<1xf32> to vector<1x1xf32>
    %76 = tpu.reciprocal %75 : vector<1x1xf32> -> vector<1x1xf32>
    %77 = vector.extract_strided_slice %18 {offsets = [0, 5], sizes = [16, 1], strides = [1, 1]} : vector<16x8xf32> to vector<16x1xf32>
    %78 = vector.broadcast %76 : vector<1x1xf32> to vector<1x9xf32>
    %79 = arith.mulf %73, %78 : vector<1x9xf32>
    %80 = vector.broadcast %77 : vector<16x1xf32> to vector<16x9xf32>
    %81 = vector.broadcast %79 : vector<1x9xf32> to vector<16x9xf32>
    %82 = arith.mulf %80, %81 : vector<16x9xf32>
    %83 = arith.addf %72, %82 : vector<16x9xf32>
    %84 = vector.extract_strided_slice %17 {offsets = [0, 54], sizes = [1, 9], strides = [1, 1]} : vector<1x72xf32> to vector<1x9xf32>
    %cst_17 = arith.constant dense<0.000000e+00> : vector<1xf32>
    %85 = vector.multi_reduction <add>, %84, %cst_17 [1] : vector<1x9xf32> to vector<1xf32>
    %86 = vector.shape_cast %85 : vector<1xf32> to vector<1x1xf32>
    %87 = tpu.reciprocal %86 : vector<1x1xf32> -> vector<1x1xf32>
    %88 = vector.extract_strided_slice %18 {offsets = [0, 6], sizes = [16, 1], strides = [1, 1]} : vector<16x8xf32> to vector<16x1xf32>
    %89 = vector.broadcast %87 : vector<1x1xf32> to vector<1x9xf32>
    %90 = arith.mulf %84, %89 : vector<1x9xf32>
    %91 = vector.broadcast %88 : vector<16x1xf32> to vector<16x9xf32>
    %92 = vector.broadcast %90 : vector<1x9xf32> to vector<16x9xf32>
    %93 = arith.mulf %91, %92 : vector<16x9xf32>
    %94 = arith.addf %83, %93 : vector<16x9xf32>
    %95 = vector.extract_strided_slice %17 {offsets = [0, 63], sizes = [1, 9], strides = [1, 1]} : vector<1x72xf32> to vector<1x9xf32>
    %cst_18 = arith.constant dense<0.000000e+00> : vector<1xf32>
    %96 = vector.multi_reduction <add>, %95, %cst_18 [1] : vector<1x9xf32> to vector<1xf32>
    %97 = vector.shape_cast %96 : vector<1xf32> to vector<1x1xf32>
    %98 = tpu.reciprocal %97 : vector<1x1xf32> -> vector<1x1xf32>
    %99 = vector.extract_strided_slice %18 {offsets = [0, 7], sizes = [16, 1], strides = [1, 1]} : vector<16x8xf32> to vector<16x1xf32>
    %100 = vector.broadcast %98 : vector<1x1xf32> to vector<1x9xf32>
    %101 = arith.mulf %95, %100 : vector<1x9xf32>
    %102 = vector.broadcast %99 : vector<16x1xf32> to vector<16x9xf32>
    %103 = vector.broadcast %101 : vector<1x9xf32> to vector<16x9xf32>
    %104 = arith.mulf %102, %103 : vector<16x9xf32>
    %105 = arith.addf %94, %104 : vector<16x9xf32>
    %c0_19 = arith.constant 0 : index
    %c0_20 = arith.constant 0 : index
    %106 = vector.load %arg5[%c0_19, %c0_20] : memref<4x256xf32, #tpu.memory_space<vmem>>, vector<4x256xf32>
    %107 = vector.extract_strided_slice %106 {offsets = [0, 0], sizes = [1, 256], strides = [1, 1]} : vector<4x256xf32> to vector<1x256xf32>
    %108 = vector.shape_cast %107 : vector<1x256xf32> to vector<1x256xf32>
    %109 = vector.broadcast %108 : vector<1x256xf32> to vector<16x256xf32>
    %cst_21 = arith.constant 5.000000e-01 : f32
    %110 = vector.broadcast %cst_21 : f32 to vector<16x256xf32>
    %111 = arith.cmpf ogt, %109, %110 : vector<16x256xf32>
    %112 = vector.extract_strided_slice %106 {offsets = [1, 0], sizes = [1, 256], strides = [1, 1]} : vector<4x256xf32> to vector<1x256xf32>
    %113 = vector.shape_cast %112 : vector<1x256xf32> to vector<1x256xf32>
    %114 = vector.broadcast %113 : vector<1x256xf32> to vector<16x256xf32>
    %cst_22 = arith.constant 5.000000e-01 : f32
    %115 = vector.broadcast %cst_22 : f32 to vector<16x256xf32>
    %116 = arith.cmpf ogt, %114, %115 : vector<16x256xf32>
    %117 = vector.extract_strided_slice %106 {offsets = [2, 0], sizes = [1, 256], strides = [1, 1]} : vector<4x256xf32> to vector<1x256xf32>
    %118 = vector.shape_cast %117 : vector<1x256xf32> to vector<1x256xf32>
    %119 = vector.broadcast %118 : vector<1x256xf32> to vector<16x256xf32>
    %cst_23 = arith.constant 5.000000e-01 : f32
    %120 = vector.broadcast %cst_23 : f32 to vector<16x256xf32>
    %121 = arith.cmpf ogt, %119, %120 : vector<16x256xf32>
    %122 = vector.extract_strided_slice %106 {offsets = [3, 0], sizes = [1, 256], strides = [1, 1]} : vector<4x256xf32> to vector<1x256xf32>
    %123 = vector.shape_cast %122 : vector<1x256xf32> to vector<1x256xf32>
    %124 = vector.broadcast %123 : vector<1x256xf32> to vector<16x256xf32>
    %cst_24 = arith.constant 5.000000e-01 : f32
    %125 = vector.broadcast %cst_24 : f32 to vector<16x256xf32>
    %126 = arith.cmpf ogt, %124, %125 : vector<16x256xf32>
    %c255_i32 = arith.constant 255 : i32
    %127 = tpu.dynamic_rotate %1 by %c255_i32 dim 1 : vector<16x256xf32>, i32 -> vector<16x256xf32>
    %c1_i32 = arith.constant 1 : i32
    %128 = tpu.dynamic_rotate %1 by %c1_i32 dim 1 : vector<16x256xf32>, i32 -> vector<16x256xf32>
    %129 = arith.select %111, %127, %128 : vector<16x256xi1>, vector<16x256xf32>
    %130 = arith.select %116, %128, %127 : vector<16x256xi1>, vector<16x256xf32>
    %c16_i32 = arith.constant 16 : i32
    %131 = tpu.dynamic_rotate %129 by %c16_i32 dim 1 : vector<16x256xf32>, i32 -> vector<16x256xf32>
    %c240_i32 = arith.constant 240 : i32
    %132 = tpu.dynamic_rotate %129 by %c240_i32 dim 1 : vector<16x256xf32>, i32 -> vector<16x256xf32>
    %133 = arith.select %121, %132, %131 : vector<16x256xi1>, vector<16x256xf32>
    %134 = arith.select %126, %131, %132 : vector<16x256xi1>, vector<16x256xf32>
    %135 = vector.extract_strided_slice %105 {offsets = [0, 0], sizes = [16, 1], strides = [1, 1]} : vector<16x9xf32> to vector<16x1xf32>
    %136 = vector.broadcast %135 : vector<16x1xf32> to vector<16x256xf32>
    %137 = arith.mulf %133, %136 : vector<16x256xf32>
    %138 = vector.extract_strided_slice %105 {offsets = [0, 3], sizes = [16, 1], strides = [1, 1]} : vector<16x9xf32> to vector<16x1xf32>
    %139 = vector.broadcast %138 : vector<16x1xf32> to vector<16x256xf32>
    %140 = arith.mulf %129, %139 : vector<16x256xf32>
    %141 = arith.addf %137, %140 : vector<16x256xf32>
    %142 = vector.extract_strided_slice %105 {offsets = [0, 6], sizes = [16, 1], strides = [1, 1]} : vector<16x9xf32> to vector<16x1xf32>
    %143 = vector.broadcast %142 : vector<16x1xf32> to vector<16x256xf32>
    %144 = arith.mulf %134, %143 : vector<16x256xf32>
    %145 = arith.addf %141, %144 : vector<16x256xf32>
    %c16_i32_25 = arith.constant 16 : i32
    %146 = tpu.dynamic_rotate %1 by %c16_i32_25 dim 1 : vector<16x256xf32>, i32 -> vector<16x256xf32>
    %c240_i32_26 = arith.constant 240 : i32
    %147 = tpu.dynamic_rotate %1 by %c240_i32_26 dim 1 : vector<16x256xf32>, i32 -> vector<16x256xf32>
    %148 = arith.select %121, %147, %146 : vector<16x256xi1>, vector<16x256xf32>
    %149 = arith.select %126, %146, %147 : vector<16x256xi1>, vector<16x256xf32>
    %150 = vector.extract_strided_slice %105 {offsets = [0, 1], sizes = [16, 1], strides = [1, 1]} : vector<16x9xf32> to vector<16x1xf32>
    %151 = vector.broadcast %150 : vector<16x1xf32> to vector<16x256xf32>
    %152 = arith.mulf %148, %151 : vector<16x256xf32>
    %153 = arith.addf %145, %152 : vector<16x256xf32>
    %154 = vector.extract_strided_slice %105 {offsets = [0, 4], sizes = [16, 1], strides = [1, 1]} : vector<16x9xf32> to vector<16x1xf32>
    %155 = vector.broadcast %154 : vector<16x1xf32> to vector<16x256xf32>
    %156 = arith.mulf %1, %155 : vector<16x256xf32>
    %157 = arith.addf %153, %156 : vector<16x256xf32>
    %158 = vector.extract_strided_slice %105 {offsets = [0, 7], sizes = [16, 1], strides = [1, 1]} : vector<16x9xf32> to vector<16x1xf32>
    %159 = vector.broadcast %158 : vector<16x1xf32> to vector<16x256xf32>
    %160 = arith.mulf %149, %159 : vector<16x256xf32>
    %161 = arith.addf %157, %160 : vector<16x256xf32>
    %c16_i32_27 = arith.constant 16 : i32
    %162 = tpu.dynamic_rotate %130 by %c16_i32_27 dim 1 : vector<16x256xf32>, i32 -> vector<16x256xf32>
    %c240_i32_28 = arith.constant 240 : i32
    %163 = tpu.dynamic_rotate %130 by %c240_i32_28 dim 1 : vector<16x256xf32>, i32 -> vector<16x256xf32>
    %164 = arith.select %121, %163, %162 : vector<16x256xi1>, vector<16x256xf32>
    %165 = arith.select %126, %162, %163 : vector<16x256xi1>, vector<16x256xf32>
    %166 = vector.extract_strided_slice %105 {offsets = [0, 2], sizes = [16, 1], strides = [1, 1]} : vector<16x9xf32> to vector<16x1xf32>
    %167 = vector.broadcast %166 : vector<16x1xf32> to vector<16x256xf32>
    %168 = arith.mulf %164, %167 : vector<16x256xf32>
    %169 = arith.addf %161, %168 : vector<16x256xf32>
    %170 = vector.extract_strided_slice %105 {offsets = [0, 5], sizes = [16, 1], strides = [1, 1]} : vector<16x9xf32> to vector<16x1xf32>
    %171 = vector.broadcast %170 : vector<16x1xf32> to vector<16x256xf32>
    %172 = arith.mulf %130, %171 : vector<16x256xf32>
    %173 = arith.addf %169, %172 : vector<16x256xf32>
    %174 = vector.extract_strided_slice %105 {offsets = [0, 8], sizes = [16, 1], strides = [1, 1]} : vector<16x9xf32> to vector<16x1xf32>
    %175 = vector.broadcast %174 : vector<16x1xf32> to vector<16x256xf32>
    %176 = arith.mulf %165, %175 : vector<16x256xf32>
    %177 = arith.addf %173, %176 : vector<16x256xf32>
    %c0_29 = arith.constant 0 : index
    %c0_30 = arith.constant 0 : index
    %c0_31 = arith.constant 0 : index
    %178 = vector.load %arg6[%c0_29, %c0_30, %c0_31] : memref<1x16x256xf32, #tpu.memory_space<vmem>>, vector<1x16x256xf32>
    %179 = vector.shape_cast %178 : vector<1x16x256xf32> to vector<16x256xf32>
    %180 = vector.shape_cast %177 : vector<16x256xf32> to vector<1x16x256xf32>
    tpu.vector_store %arg6[%c0_29, %c0_30, %c0_31], %180 {strides = array<i32>} : memref<1x16x256xf32, #tpu.memory_space<vmem>>, vector<1x16x256xf32>,
    %181 = arith.subf %1, %177 : vector<16x256xf32>
    %c0_32 = arith.constant 0 : index
    %c0_33 = arith.constant 0 : index
    %c0_34 = arith.constant 0 : index
    %182 = vector.load %arg7[%c0_32, %c0_33, %c0_34] : memref<1x16x256xf32, #tpu.memory_space<vmem>>, vector<1x16x256xf32>
    %183 = vector.shape_cast %182 : vector<1x16x256xf32> to vector<16x256xf32>
    %184 = vector.shape_cast %181 : vector<16x256xf32> to vector<1x16x256xf32>
    tpu.vector_store %arg7[%c0_32, %c0_33, %c0_34], %184 {strides = array<i32>} : memref<1x16x256xf32, #tpu.memory_space<vmem>>, vector<1x16x256xf32>,
    return
  }
  func.func @transform_0(%arg0: i32) -> (i32, i32, i32) {
    %c0_i32 = arith.constant 0 : i32
    %c0_i32_0 = arith.constant 0 : i32
    %c0_i32_1 = arith.constant 0 : i32
    return %arg0, %c0_i32, %c0_i32_0 : i32, i32, i32
  }
  func.func @transform_1(%arg0: i32) -> (i32, i32) {
    %c0_i32 = arith.constant 0 : i32
    %c0_i32_0 = arith.constant 0 : i32
    %c0_i32_1 = arith.constant 0 : i32
    return %c0_i32, %c0_i32_0 : i32, i32
  }
  func.func @transform_2(%arg0: i32) -> (i32, i32) {
    %c0_i32 = arith.constant 0 : i32
    %c0_i32_0 = arith.constant 0 : i32
    %c0_i32_1 = arith.constant 0 : i32
    return %c0_i32, %c0_i32_0 : i32, i32
  }
  func.func @transform_3(%arg0: i32) -> (i32, i32) {
    %c0_i32 = arith.constant 0 : i32
    %c0_i32_0 = arith.constant 0 : i32
    %c0_i32_1 = arith.constant 0 : i32
    return %c0_i32, %c0_i32_0 : i32, i32
  }
  func.func @transform_4(%arg0: i32) -> (i32, i32) {
    %c0_i32 = arith.constant 0 : i32
    %c0_i32_0 = arith.constant 0 : i32
    %c0_i32_1 = arith.constant 0 : i32
    return %c0_i32, %c0_i32_0 : i32, i32
  }
  func.func @transform_5(%arg0: i32) -> (i32, i32, i32) {
    %c0_i32 = arith.constant 0 : i32
    %c0_i32_0 = arith.constant 0 : i32
    %c0_i32_1 = arith.constant 0 : i32
    return %arg0, %c0_i32, %c0_i32_0 : i32, i32, i32
  }
  func.func @transform_6(%arg0: i32) -> (i32, i32, i32) {
    %c0_i32 = arith.constant 0 : i32
    %c0_i32_0 = arith.constant 0 : i32
    %c0_i32_1 = arith.constant 0 : i32
    return %arg0, %c0_i32, %c0_i32_0 : i32, i32, i32
  }
}

</mosaic_0001>

<llo_original>
// kernel: tpu_custom_call.1
$region0: #{tpu_custom_call.1}
  #allocation0 [shape = 'u32[]', space=smem, size = 0x4, offset = 0x4, fixed_abs, tag = 'smem constant byte address 0x4 - core index']
  #allocation1 [shape = 'u32[144,128]{1,0:T(1,128)}', space=vmem, size = 0x12000, scoped, tag = 'internal scratch']
  %s0 = inlined_call_operand.hbm [shape: f32[2,16,256], index: 0, kind: input, shape index: {}]
  %s1 = inlined_call_operand.vmem [shape: f32[16,72], index: 1, kind: input, shape index: {}]
  %s2 = inlined_call_operand.vmem [shape: f32[1,72], index: 2, kind: input, shape index: {}]
  %s3 = inlined_call_operand.vmem [shape: f32[16,8], index: 3, kind: input, shape index: {}]
  %s4 = inlined_call_operand.vmem [shape: f32[4,256], index: 4, kind: input, shape index: {}]
  %s5 = inlined_call_operand.hbm [shape: f32[2,16,256], index: 5, kind: output, shape index: {0}]
  %s6 = inlined_call_operand.hbm [shape: f32[2,16,256], index: 6, kind: output, shape index: {1}]
  %7 = xla_tuple %s5, %s6
  %s8 = sld [smem:[#allocation0]]
  $region65: #{tpu_custom_call.1} parent=0
    _
  %s10 = ssub.s32 1, %s8
  %s11 = scalar_select 0, %s10, %s8
  $region1: #{tpu_custom_call.1} parent=0
    #allocation2 [shape = 'u8[32768]{0}', space=vmem, size = 0x8000, scoped, tag = 'input window, operand 0']
    #allocation3 [shape = 's32[2]{0}', space=sflag, size = 0x8, scoped, tag = 'scoped memory for tpu_custom_call.1']
    #allocation4 [shape = 's32[2]{0}', space=sflag, size = 0x8, scoped, tag = 'scoped memory for tpu_custom_call.1']
    #allocation5 [shape = 'u8[32768]{0}', space=vmem, size = 0x8000, scoped, tag = 'output window, operand 0']
    #allocation6 [shape = 'u8[32768]{0}', space=vmem, size = 0x8000, scoped, tag = 'output window, operand 1']
    #allocation7 [shape = 's32[2]{0}', space=sflag, size = 0x8, scoped, tag = 'scoped memory for tpu_custom_call.1']
    %12 = vsyncpa [#allocation3], 0
    %s13 = scalar_lea.sflag [#allocation3], 1
    %14 = vsyncpa %s13, 0
    %15 = vsyncpa [#allocation4], 0
    %s16 = scalar_lea.sflag [#allocation4], 1
    %17 = vsyncpa %s16, 0
    %18 = vsyncpa [#allocation7], 0
    %s19 = scalar_lea.sflag [#allocation7], 1
    %20 = vsyncpa %s19, 0
    loop: start=0, step=1, limit=4
    $region2: #{tpu_custom_call.1} parent=1 // loop_pre_header
      _
    $region3: #{tpu_custom_call.1} parent=1 // loop_header
      %s22 = sphi 0, %s26
      %p23 = scmp.ge.s32.totalorder %s22, 4
      %s32 = sphi 0, %s34
      %s35 = sphi 0, %s32
      %s36 = sphi 0, %s35
      %s52 = sphi 0, %s36
      %s56 = sphi 0, %s56
      %s58 = sphi 0, %s56
      %s59 = sphi 0, %s58
      %s73 = sphi 0, %s59
      %s77 = sphi 0, %s77
      %s79 = sphi 0, %s77
      %s80 = sphi 0, %s79
      %s94 = sphi 0, %s80
      %s98 = sphi 0, %s98
      %s100 = sphi 0, %s98
      %s101 = sphi 0, %s100
      %s115 = sphi 0, %s101
      %s119 = sphi 0, %s119
      %s121 = sphi 0, %s119
      %s122 = sphi 0, %s121
      %s136 = sphi 0, %s122
      %s142 = sphi 0, %s144
      %s145 = sphi 0, %s142
      %s146 = sphi 0, %s145
      %s162 = sphi 0, %s146
      %s168 = sphi 0, %s170
      %s171 = sphi 0, %s168
      %s172 = sphi 0, %s171
      %s188 = sphi 0, %s172
    $region4: #{tpu_custom_call.1} parent=1 // loop_header_branch
      %25 = sbr.rel (%p23) target = $region8
    $region5: #{tpu_custom_call.1} parent=1 // loop_body
      %s27 = ssub.s32 %s22, 1
      %s28 = ssub.s32 %s22, 2
      %s29 = sadd.s32 %s22, 1
      %s30 = ssub.s32 %s22, %s29
      %p31 = scmp.eq.s32.totalorder %s30, 0
      %s33 = sadd.s32 %s32, 1
      %s34 = scalar_select %p31, %s32, %s33
      %p37 = pneg %p31
      %p38 = scmp.eq.s32.totalorder %s22, 1
      %p39 = por %p37, %p38
      %p40 = scmp.ne.s32.totalorder %s32, %s35
      %p41 = scmp.eq.s32.totalorder %s22, 0
      %p42 = por %p40, %p41
      %p43 = scmp.ne.s32.totalorder %s32, %s35
      %p44 = scmp.eq.s32.totalorder %s27, 1
      %p45 = por %p43, %p44
      %p46 = scmp.ne.s32.totalorder %s35, %s36
      %p47 = scmp.eq.s32.totalorder %s27, 0
      %p48 = por %p46, %p47
      %p49 = scmp.ne.s32.totalorder %s35, %s36
      %p50 = scmp.eq.s32.totalorder %s28, 1
      %p51 = por %p49, %p50
      %p53 = scmp.ne.s32.totalorder %s36, %s52
      %p54 = scmp.eq.s32.totalorder %s28, 0
      %p55 = por %p53, %p54
      %s57 = sadd.s32 %s56, 1
      %p60 = scmp.eq.s32.totalorder %s22, 1
      %p61 = scmp.ne.s32.totalorder %s56, %s58
      %p62 = scmp.eq.s32.totalorder %s22, 0
      %p63 = por %p61, %p62
      %p64 = scmp.ne.s32.totalorder %s56, %s58
      %p65 = scmp.eq.s32.totalorder %s27, 1
      %p66 = por %p64, %p65
      %p67 = scmp.ne.s32.totalorder %s58, %s59
      %p68 = scmp.eq.s32.totalorder %s27, 0
      %p69 = por %p67, %p68
      %p70 = scmp.ne.s32.totalorder %s58, %s59
      %p71 = scmp.eq.s32.totalorder %s28, 1
      %p72 = por %p70, %p71
      %p74 = scmp.ne.s32.totalorder %s59, %s73
      %p75 = scmp.eq.s32.totalorder %s28, 0
      %p76 = por %p74, %p75
      %s78 = sadd.s32 %s77, 1
      %p81 = scmp.eq.s32.totalorder %s22, 1
      %p82 = scmp.ne.s32.totalorder %s77, %s79
      %p83 = scmp.eq.s32.totalorder %s22, 0
      %p84 = por %p82, %p83
      %p85 = scmp.ne.s32.totalorder %s77, %s79
      %p86 = scmp.eq.s32.totalorder %s27, 1
      %p87 = por %p85, %p86
      %p88 = scmp.ne.s32.totalorder %s79, %s80
      %p89 = scmp.eq.s32.totalorder %s27, 0
      %p90 = por %p88, %p89
      %p91 = scmp.ne.s32.totalorder %s79, %s80
      %p92 = scmp.eq.s32.totalorder %s28, 1
      %p93 = por %p91, %p92
      %p95 = scmp.ne.s32.totalorder %s80, %s94
      %p96 = scmp.eq.s32.totalorder %s28, 0
      %p97 = por %p95, %p96
      %s99 = sadd.s32 %s98, 1
      %p102 = scmp.eq.s32.totalorder %s22, 1
      %p103 = scmp.ne.s32.totalorder %s98, %s100
      %p104 = scmp.eq.s32.totalorder %s22, 0
      %p105 = por %p103, %p104
      %p106 = scmp.ne.s32.totalorder %s98, %s100
      %p107 = scmp.eq.s32.totalorder %s27, 1
      %p108 = por %p106, %p107
      %p109 = scmp.ne.s32.totalorder %s100, %s101
      %p110 = scmp.eq.s32.totalorder %s27, 0
      %p111 = por %p109, %p110
      %p112 = scmp.ne.s32.totalorder %s100, %s101
      %p113 = scmp.eq.s32.totalorder %s28, 1
      %p114 = por %p112, %p113
      %p116 = scmp.ne.s32.totalorder %s101, %s115
      %p117 = scmp.eq.s32.totalorder %s28, 0
      %p118 = por %p116, %p117
      %s120 = sadd.s32 %s119, 1
      %p123 = scmp.eq.s32.totalorder %s22, 1
      %p124 = scmp.ne.s32.totalorder %s119, %s121
      %p125 = scmp.eq.s32.totalorder %s22, 0
      %p126 = por %p124, %p125
      %p127 = scmp.ne.s32.totalorder %s119, %s121
      %p128 = scmp.eq.s32.totalorder %s27, 1
      %p129 = por %p127, %p128
      %p130 = scmp.ne.s32.totalorder %s121, %s122
      %p131 = scmp.eq.s32.totalorder %s27, 0
      %p132 = por %p130, %p131
      %p133 = scmp.ne.s32.totalorder %s121, %s122
      %p134 = scmp.eq.s32.totalorder %s28, 1
      %p135 = por %p133, %p134
      %p137 = scmp.ne.s32.totalorder %s122, %s136
      %p138 = scmp.eq.s32.totalorder %s28, 0
      %p139 = por %p137, %p138
      %s140 = ssub.s32 %s22, %s29
      %p141 = scmp.eq.s32.totalorder %s140, 0
      %s143 = sadd.s32 %s142, 1
      %s144 = scalar_select %p141, %s142, %s143
      %p147 = pneg %p141
      %p148 = scmp.eq.s32.totalorder %s22, 1
      %p149 = por %p147, %p148
      %p150 = scmp.ne.s32.totalorder %s142, %s145
      %p151 = scmp.eq.s32.totalorder %s22, 0
      %p152 = por %p150, %p151
      %p153 = scmp.ne.s32.totalorder %s142, %s145
      %p154 = scmp.eq.s32.totalorder %s27, 1
      %p155 = por %p153, %p154
      %p156 = scmp.ne.s32.totalorder %s145, %s146
      %p157 = scmp.eq.s32.totalorder %s27, 0
      %p158 = por %p156, %p157
      %p159 = scmp.ne.s32.totalorder %s145, %s146
      %p160 = scmp.eq.s32.totalorder %s28, 1
      %p161 = por %p159, %p160
      %p163 = scmp.ne.s32.totalorder %s146, %s162
      %p164 = scmp.eq.s32.totalorder %s28, 0
      %p165 = por %p163, %p164
      %s166 = ssub.s32 %s22, %s29
      %p167 = scmp.eq.s32.totalorder %s166, 0
      %s169 = sadd.s32 %s168, 1
      %s170 = scalar_select %p167, %s168, %s169
      %p173 = pneg %p167
      %p174 = scmp.eq.s32.totalorder %s22, 1
      %p175 = por %p173, %p174
      %p176 = scmp.ne.s32.totalorder %s168, %s171
      %p177 = scmp.eq.s32.totalorder %s22, 0
      %p178 = por %p176, %p177
      %p179 = scmp.ne.s32.totalorder %s168, %s171
      %p180 = scmp.eq.s32.totalorder %s27, 1
      %p181 = por %p179, %p180
      %p182 = scmp.ne.s32.totalorder %s171, %s172
      %p183 = scmp.eq.s32.totalorder %s27, 0
      %p184 = por %p182, %p183
      %p185 = scmp.ne.s32.totalorder %s171, %s172
      %p186 = scmp.eq.s32.totalorder %s28, 1
      %p187 = por %p185, %p186
      %p189 = scmp.ne.s32.totalorder %s172, %s188
      %p190 = scmp.eq.s32.totalorder %s28, 0
      %p191 = por %p189, %p190
      %p192 = scmp.le.s32.totalorder 1, %s22
      %p193 = scmp.lt.s32.totalorder %s22, 3
      %p194 = pnand %p192, %p193
      %p195 = pneg %p194
      // Predicated region
      $region9: #{tpu_custom_call.1} parent=5 // pred_check
        _
      $region10: #{tpu_custom_call.1} parent=5 // pred_check_branch
        %197 = sbr.rel (%p194) target = $region12
      $region11: #{tpu_custom_call.1} parent=5 // pred_region
        %s198 = ssub.s32 %s22, 1
        // Predicated region
        $region13: #{tpu_custom_call.1} parent=11 // pred_check
          %p199 = pneg %p69
        $region14: #{tpu_custom_call.1} parent=11 // pred_check_branch
          %201 = sbr.rel (%p199) target = $region16
        $region15: #{tpu_custom_call.1} parent=11 // pred_region
          _
        $region16: #{tpu_custom_call.1} parent=11 // pred_fallthru
          _
        // Predicated region
        $region17: #{tpu_custom_call.1} parent=11 // pred_check
          %p202 = pneg %p90
        $region18: #{tpu_custom_call.1} parent=11 // pred_check_branch
          %204 = sbr.rel (%p202) target = $region20
        $region19: #{tpu_custom_call.1} parent=11 // pred_region
          _
        $region20: #{tpu_custom_call.1} parent=11 // pred_fallthru
          _
        // Predicated region
        $region21: #{tpu_custom_call.1} parent=11 // pred_check
          %p205 = pneg %p111
        $region22: #{tpu_custom_call.1} parent=11 // pred_check_branch
          %207 = sbr.rel (%p205) target = $region24
        $region23: #{tpu_custom_call.1} parent=11 // pred_region
          _
        $region24: #{tpu_custom_call.1} parent=11 // pred_fallthru
          _
        // Predicated region
        $region25: #{tpu_custom_call.1} parent=11 // pred_check
          %p208 = pneg %p132
        $region26: #{tpu_custom_call.1} parent=11 // pred_check_branch
          %210 = sbr.rel (%p208) target = $region28
        $region27: #{tpu_custom_call.1} parent=11 // pred_region
          _
        $region28: #{tpu_custom_call.1} parent=11 // pred_fallthru
          _
      $region12: #{tpu_custom_call.1} parent=5 // pred_fallthru
        _
      %p211 = scmp.lt.s32.totalorder %s22, 2
      // Predicated region
      $region29: #{tpu_custom_call.1} parent=5 // pred_check
        %p212 = pneg %p211
      $region30: #{tpu_custom_call.1} parent=5 // pred_check_branch
        %214 = sbr.rel (%p212) target = $region32
      $region31: #{tpu_custom_call.1} parent=5 // pred_region
        // Predicated region
        $region33: #{tpu_custom_call.1} parent=31 // pred_check
          %p215 = pneg %p42
        $region34: #{tpu_custom_call.1} parent=31 // pred_check_branch
          %217 = sbr.rel (%p215) target = $region36
        $region35: #{tpu_custom_call.1} parent=31 // pred_region
          %s218 = sand.u32 %s32, 1
          %s219 = scalar_lea.sflag [#allocation3], %s218
          %s220 = sand.u32 %s32, 1
          %s221 = smul.addr %s220, 32
          %s222 = scalar_lea.vmem [#allocation2], %s221
          %s224 = ssub.s32 512, 512
          %225 = vsyncadd %s219, %s224
          %s226 = smul.addr %s22, 4
          %s227 = smul.addr %s226, 128
          %s228 = scalar_lea.hbm %s0, %s227
          %s229 = sshll.u32 %s222, 4
          %s230 = int_to_ptr.vmem [resolvable:$true] %s229
          %235 = dma.hbm_to_vmem [thread:$0]  %s228, 512, %s230, %s219, 256, 256, 16
        $region36: #{tpu_custom_call.1} parent=31 // pred_fallthru
          _
      $region32: #{tpu_custom_call.1} parent=5 // pred_fallthru
        _
      %p236 = scmp.le.s32.totalorder 1, %s22
      %p237 = scmp.lt.s32.totalorder %s22, 3
      %p238 = pnand %p236, %p237
      %p239 = pneg %p238
      // Predicated region
      $region37: #{tpu_custom_call.1} parent=5 // pred_check
        _
      $region38: #{tpu_custom_call.1} parent=5 // pred_check_branch
        %241 = sbr.rel (%p238) target = $region40
      $region39: #{tpu_custom_call.1} parent=5 // pred_region
        %s242 = ssub.s32 %s22, 1
        %s243 = sand.u32 %s35, 1
        %s244 = scalar_lea.sflag [#allocation3], %s243
        %s245 = sand.u32 %s35, 1
        %s246 = smul.addr %s245, 32
        %s247 = scalar_lea.vmem [#allocation2], %s246
        // Predicated region
        $region41: #{tpu_custom_call.1} parent=39 // pred_check
          %p248 = pneg %p48
        $region42: #{tpu_custom_call.1} parent=39 // pred_check_branch
          %250 = sbr.rel (%p248) target = $region44
        $region43: #{tpu_custom_call.1} parent=39 // pred_region
          %251 = dma.done %s244, 512
        $region44: #{tpu_custom_call.1} parent=39 // pred_fallthru
          _
        %s252 = sand.u32 %s35, 1
        %s253 = scalar_lea.sflag [#allocation3], %s252
        %s254 = sand.u32 %s35, 1
        %s255 = smul.addr %s254, 32
        %s256 = scalar_lea.vmem [#allocation2], %s255
        %p257 = pneg %p48
        %p258 = pneg %p45
        %p259 = pneg %p69
        %p260 = pneg %p66
        %p261 = pneg %p90
        %p262 = pneg %p87
        %p263 = pneg %p111
        %p264 = pneg %p108
        %p265 = pneg %p132
        %p266 = pneg %p129
        %p267 = pneg %p158
        %p268 = pneg %p155
        %s269 = sand.u32 %s145, 1
        %s270 = scalar_lea.sflag [#allocation4], %s269
        %s271 = sand.u32 %s145, 1
        %s272 = smul.addr %s271, 32
        %s273 = scalar_lea.vmem [#allocation5], %s272
        %p274 = pneg %p184
        %p275 = pneg %p181
        %s276 = sand.u32 %s171, 1
        %s277 = scalar_lea.sflag [#allocation7], %s276
        %s278 = sand.u32 %s171, 1
        %s279 = smul.addr %s278, 32
        %s280 = scalar_lea.vmem [#allocation6], %s279
        %v281 = vld [vmem:[%s247] sm:$0xff]
        %v282 = vld [vmem:[%s247 + $0x8] sm:$0xff]
        %v283 = vld [vmem:[%s247 + $0x10] sm:$0xff]
        %v284 = vld [vmem:[%s247 + $0x18] sm:$0xff]
        %v285 = vadd.f32 %v281, %v282
        %286 = vadd.xlane.f32.xlu0 %v285
        %v287 = vpop.xlane.xlu0 %286
        %v288 = vadd.f32 %v283, %v284
        %289 = vadd.xlane.f32.xlu0 %v288
        %v290 = vpop.xlane.xlu0 %289
        %v291 = vmul.f32 %v287, 0.00390625
        %v292 = vmul.f32 %v290, 0.00390625
        %v293 = vld [vmem:[%s1] sm:$0xff]
        %v294 = vld [vmem:[%s1 + $0x8] sm:$0xff]
        %v295 = vmul.f32 %v293, %v291
        %v296 = vmul.f32 %v294, %v292
        %vm297 = vcmask 588800
        %v298 = vsel %vm297, %v295, 0.0
        %v299 = vsel %vm297, %v296, 0.0
        %v300 = vadd.f32 %v298, %v299
        %v301 = vrot.slane %v300, 4
        %v302 = vadd.f32 %v300, %v301
        %v303 = vrot.slane %v302, 2
        %v304 = vadd.f32 %v302, %v303
        %v305 = vrot.slane %v304, 1
        %v306 = vadd.f32 %v304, %v305
        %v307 = vld [vmem:[%s2] sm:$0x1]
        %v308 = vadd.f32 %v306, %v307
        %vm309 = vcmask 581632
        %v310 = vsel %vm309, %v308, -inf
        %311 = vmax.xlane.f32.xlu0 %v310
        %v312 = vpop.xlane.xlu0 %311
        %v313 = vsub.f32 %v308, %v312
        %v314 = vmul.f32 %v313, 1.442695
        %v315 = vpow.pop %v314
        %v316 = vld [vmem:[%s3] sm:$0xff]
        %v317 = vld [vmem:[%s3 + $0x8] sm:$0xff]
        %vm318 = vcmask 65536
        %v319 = vsel %vm318, %v315, 0.0
        %320 = vadd.xlane.f32.xlu0 %v319
        %v321 = vpop.xlane.xlu0 %320
        %v322 = vrcp.pop %v321
        %v323 = vmul.f32 %v315, %v322
        %325 = vset.pattern.permute.xlu0 0
        %326 = vperm.xlu0 %325, %v316
        %v327 = vpop.permute.xlu0 %326
        %330 = vset.pattern.permute.xlu0 0
        %331 = vperm.xlu0 %330, %v317
        %v332 = vpop.permute.xlu0 %331
        %v334 = vlaneseq
        %v335 = vshrl.u32 %v334, 7
        %v336 = vsub.s32 0, %v335
        %v337 = vrot.slane %v323, %v336
        %v338 = vmul.f32 %v327, %v337
        %v339 = vmul.f32 %v332, %v337
        %341 = vrot.lane.b32.xlu0 %v315, 119
        %v342 = vpop.permute.xlu0 %341
        %v344 = vsel %vm318, %v342, 0.0
        %345 = vadd.xlane.f32.xlu0 %v344
        %v346 = vpop.xlane.xlu0 %345
        %v347 = vrcp.pop %v346
        %v348 = vmul.f32 %v315, %v347
        %349 = vset.pattern.permute.xlu0 1
        %350 = vperm.xlu0 %349, %v316
        %v351 = vpop.permute.xlu0 %350
        %353 = vset.pattern.permute.xlu0 1
        %354 = vperm.xlu0 %353, %v317
        %v355 = vpop.permute.xlu0 %354
        %v357 = vlaneseq
        %v358 = vshrl.u32 %v357, 7
        %v359 = vsub.s32 0, %v358
        %v360 = vrot.slane %v348, %v359
        %v361 = vmul.f32 %v351, %v360
        %v362 = vmul.f32 %v355, %v360
        %365 = vrot.lane.b32.xlu0 %v361, 119
        %v366 = vpop.permute.xlu0 %365
        %367 = vrot.lane.b32.xlu0 %v362, 119
        %v368 = vpop.permute.xlu0 %367
        %v371 = vadd.f32 %v338, %v366
        %v372 = vadd.f32 %v339, %v368
        %373 = vrot.lane.b32.xlu0 %v315, 110
        %v374 = vpop.permute.xlu0 %373
        %v376 = vsel %vm318, %v374, 0.0
        %377 = vadd.xlane.f32.xlu0 %v376
        %v378 = vpop.xlane.xlu0 %377
        %v379 = vrcp.pop %v378
        %v380 = vmul.f32 %v315, %v379
        %381 = vset.pattern.permute.xlu0 2
        %382 = vperm.xlu0 %381, %v316
        %v383 = vpop.permute.xlu0 %382
        %385 = vset.pattern.permute.xlu0 2
        %386 = vperm.xlu0 %385, %v317
        %v387 = vpop.permute.xlu0 %386
        %v389 = vlaneseq
        %v390 = vshrl.u32 %v389, 7
        %v391 = vsub.s32 0, %v390
        %v392 = vrot.slane %v380, %v391
        %v393 = vmul.f32 %v383, %v392
        %v394 = vmul.f32 %v387, %v392
        %397 = vrot.lane.b32.xlu0 %v393, 110
        %v398 = vpop.permute.xlu0 %397
        %399 = vrot.lane.b32.xlu0 %v394, 110
        %v400 = vpop.permute.xlu0 %399
        %v403 = vadd.f32 %v371, %v398
        %v404 = vadd.f32 %v372, %v400
        %405 = vrot.lane.b32.xlu0 %v315, 101
        %v406 = vpop.permute.xlu0 %405
        %v408 = vsel %vm318, %v406, 0.0
        %409 = vadd.xlane.f32.xlu0 %v408
        %v410 = vpop.xlane.xlu0 %409
        %v411 = vrcp.pop %v410
        %v412 = vmul.f32 %v315, %v411
        %413 = vset.pattern.permute.xlu0 3
        %414 = vperm.xlu0 %413, %v316
        %v415 = vpop.permute.xlu0 %414
        %417 = vset.pattern.permute.xlu0 3
        %418 = vperm.xlu0 %417, %v317
        %v419 = vpop.permute.xlu0 %418
        %v421 = vlaneseq
        %v422 = vshrl.u32 %v421, 7
        %v423 = vsub.s32 0, %v422
        %v424 = vrot.slane %v412, %v423
        %v425 = vmul.f32 %v415, %v424
        %v426 = vmul.f32 %v419, %v424
        %429 = vrot.lane.b32.xlu0 %v425, 101
        %v430 = vpop.permute.xlu0 %429
        %431 = vrot.lane.b32.xlu0 %v426, 101
        %v432 = vpop.permute.xlu0 %431
        %v435 = vadd.f32 %v403, %v430
        %v436 = vadd.f32 %v404, %v432
        %437 = vrot.lane.b32.xlu0 %v315, 92
        %v438 = vpop.permute.xlu0 %437
        %v440 = vsel %vm318, %v438, 0.0
        %441 = vadd.xlane.f32.xlu0 %v440
        %v442 = vpop.xlane.xlu0 %441
        %v443 = vrcp.pop %v442
        %v444 = vmul.f32 %v315, %v443
        %445 = vset.pattern.permute.xlu0 4
        %446 = vperm.xlu0 %445, %v316
        %v447 = vpop.permute.xlu0 %446
        %449 = vset.pattern.permute.xlu0 4
        %450 = vperm.xlu0 %449, %v317
        %v451 = vpop.permute.xlu0 %450
        %v453 = vlaneseq
        %v454 = vshrl.u32 %v453, 7
        %v455 = vsub.s32 0, %v454
        %v456 = vrot.slane %v444, %v455
        %v457 = vmul.f32 %v447, %v456
        %v458 = vmul.f32 %v451, %v456
        %461 = vrot.lane.b32.xlu0 %v457, 92
        %v462 = vpop.permute.xlu0 %461
        %463 = vrot.lane.b32.xlu0 %v458, 92
        %v464 = vpop.permute.xlu0 %463
        %v467 = vadd.f32 %v435, %v462
        %v468 = vadd.f32 %v436, %v464
        %469 = vrot.lane.b32.xlu0 %v315, 83
        %v470 = vpop.permute.xlu0 %469
        %v472 = vsel %vm318, %v470, 0.0
        %473 = vadd.xlane.f32.xlu0 %v472
        %v474 = vpop.xlane.xlu0 %473
        %v475 = vrcp.pop %v474
        %v476 = vmul.f32 %v315, %v475
        %477 = vset.pattern.permute.xlu0 5
        %478 = vperm.xlu0 %477, %v316
        %v479 = vpop.permute.xlu0 %478
        %481 = vset.pattern.permute.xlu0 5
        %482 = vperm.xlu0 %481, %v317
        %v483 = vpop.permute.xlu0 %482
        %v485 = vlaneseq
        %v486 = vshrl.u32 %v485, 7
        %v487 = vsub.s32 0, %v486
        %v488 = vrot.slane %v476, %v487
        %v489 = vmul.f32 %v479, %v488
        %v490 = vmul.f32 %v483, %v488
        %493 = vrot.lane.b32.xlu0 %v489, 83
        %v494 = vpop.permute.xlu0 %493
        %495 = vrot.lane.b32.xlu0 %v490, 83
        %v496 = vpop.permute.xlu0 %495
        %v499 = vadd.f32 %v467, %v494
        %v500 = vadd.f32 %v468, %v496
        %501 = vrot.lane.b32.xlu0 %v315, 74
        %v502 = vpop.permute.xlu0 %501
        %v504 = vsel %vm318, %v502, 0.0
        %505 = vadd.xlane.f32.xlu0 %v504
        %v506 = vpop.xlane.xlu0 %505
        %v507 = vrcp.pop %v506
        %v508 = vmul.f32 %v315, %v507
        %509 = vset.pattern.permute.xlu0 6
        %510 = vperm.xlu0 %509, %v316
        %v511 = vpop.permute.xlu0 %510
        %513 = vset.pattern.permute.xlu0 6
        %514 = vperm.xlu0 %513, %v317
        %v515 = vpop.permute.xlu0 %514
        %v517 = vlaneseq
        %v518 = vshrl.u32 %v517, 7
        %v519 = vsub.s32 0, %v518
        %v520 = vrot.slane %v508, %v519
        %v521 = vmul.f32 %v511, %v520
        %v522 = vmul.f32 %v515, %v520
        %525 = vrot.lane.b32.xlu0 %v521, 74
        %v526 = vpop.permute.xlu0 %525
        %527 = vrot.lane.b32.xlu0 %v522, 74
        %v528 = vpop.permute.xlu0 %527
        %v531 = vadd.f32 %v499, %v526
        %v532 = vadd.f32 %v500, %v528
        %533 = vrot.lane.b32.xlu0 %v315, 65
        %v534 = vpop.permute.xlu0 %533
        %v536 = vsel %vm318, %v534, 0.0
        %537 = vadd.xlane.f32.xlu0 %v536
        %v538 = vpop.xlane.xlu0 %537
        %v539 = vrcp.pop %v538
        %v540 = vmul.f32 %v315, %v539
        %541 = vset.pattern.permute.xlu0 7
        %542 = vperm.xlu0 %541, %v316
        %v543 = vpop.permute.xlu0 %542
        %545 = vset.pattern.permute.xlu0 7
        %546 = vperm.xlu0 %545, %v317
        %v547 = vpop.permute.xlu0 %546
        %v549 = vlaneseq
        %v550 = vshrl.u32 %v549, 7
        %v551 = vsub.s32 0, %v550
        %v552 = vrot.slane %v540, %v551
        %v553 = vmul.f32 %v543, %v552
        %v554 = vmul.f32 %v547, %v552
        %557 = vrot.lane.b32.xlu0 %v553, 65
        %v558 = vpop.permute.xlu0 %557
        %559 = vrot.lane.b32.xlu0 %v554, 65
        %v560 = vpop.permute.xlu0 %559
        %v563 = vadd.f32 %v531, %v558
        %v564 = vadd.f32 %v532, %v560
        %v565 = vld [vmem:[%s4] sm:$0xff]
        %v567 = vlaneseq
        %v568 = vshrl.u32 %v567, 7
        %v569 = vsub.s32 0, %v568
        %v570 = vrot.slane %v565, %v569
        %v571 = vlaneseq
        %v572 = vshrl.u32 %v571, 7
        %v573 = vsub.s32 4, %v572
        %v574 = vrot.slane %v565, %v573
        %v577 = vlaneseq
        %v578 = vshrl.u32 %v577, 7
        %v579 = vsub.s32 0, %v578
        %v580 = vrot.slane %v570, %v579
        %v581 = vlaneseq
        %v582 = vshrl.u32 %v581, 7
        %v583 = vsub.s32 0, %v582
        %v584 = vrot.slane %v574, %v583
        %vm585 = vcmp.gt.f32.partialorder %v580, 0.5
        %vm586 = vcmp.gt.f32.partialorder %v584, 0.5
        %v587 = vlaneseq
        %v588 = vshrl.u32 %v587, 7
        %v589 = vsub.s32 1, %v588
        %v590 = vrot.slane %v565, %v589
        %v591 = vlaneseq
        %v592 = vshrl.u32 %v591, 7
        %v593 = vsub.s32 5, %v592
        %v594 = vrot.slane %v565, %v593
        %v597 = vlaneseq
        %v598 = vshrl.u32 %v597, 7
        %v599 = vsub.s32 1, %v598
        %v600 = vrot.slane %v590, %v599
        %v601 = vlaneseq
        %v602 = vshrl.u32 %v601, 7
        %v603 = vsub.s32 1, %v602
        %v604 = vrot.slane %v594, %v603
        %vm605 = vcmp.gt.f32.partialorder %v600, 0.5
        %vm606 = vcmp.gt.f32.partialorder %v604, 0.5
        %v607 = vlaneseq
        %v608 = vshrl.u32 %v607, 7
        %v609 = vsub.s32 2, %v608
        %v610 = vrot.slane %v565, %v609
        %v611 = vlaneseq
        %v612 = vshrl.u32 %v611, 7
        %v613 = vsub.s32 6, %v612
        %v614 = vrot.slane %v565, %v613
        %v617 = vlaneseq
        %v618 = vshrl.u32 %v617, 7
        %v619 = vsub.s32 2, %v618
        %v620 = vrot.slane %v610, %v619
        %v621 = vlaneseq
        %v622 = vshrl.u32 %v621, 7
        %v623 = vsub.s32 2, %v622
        %v624 = vrot.slane %v614, %v623
        %vm625 = vcmp.gt.f32.partialorder %v620, 0.5
        %vm626 = vcmp.gt.f32.partialorder %v624, 0.5
        %v627 = vlaneseq
        %v628 = vshrl.u32 %v627, 7
        %v629 = vsub.s32 3, %v628
        %v630 = vrot.slane %v565, %v629
        %v631 = vlaneseq
        %v632 = vshrl.u32 %v631, 7
        %v633 = vsub.s32 7, %v632
        %v634 = vrot.slane %v565, %v633
        %v637 = vlaneseq
        %v638 = vshrl.u32 %v637, 7
        %v639 = vsub.s32 3, %v638
        %v640 = vrot.slane %v630, %v639
        %v641 = vlaneseq
        %v642 = vshrl.u32 %v641, 7
        %v643 = vsub.s32 3, %v642
        %v644 = vrot.slane %v634, %v643
        %vm645 = vcmp.gt.f32.partialorder %v640, 0.5
        %vm646 = vcmp.gt.f32.partialorder %v644, 0.5
        %647 = vrot.lane.b32.xlu0 %v281, 127
        %v648 = vpop.permute.xlu0 %647
        %649 = vrot.lane.b32.xlu0 %v283, 127
        %v650 = vpop.permute.xlu0 %649
        %651 = vrot.lane.b32.xlu0 %v282, 127
        %v652 = vpop.permute.xlu0 %651
        %653 = vrot.lane.b32.xlu0 %v284, 127
        %v654 = vpop.permute.xlu0 %653
        %v655 = vlaneseq
        %v656 = vand.u32 %v655, 127
        %vm657 = vcmp.lt.s32.totalorder %v656, 127
        %v658 = vsel %vm657, %v648, %v652
        %v659 = vsel %vm657, %v650, %v654
        %v660 = vsel %vm657, %v652, %v648
        %v661 = vsel %vm657, %v654, %v650
        %662 = vrot.lane.b32.xlu0 %v281, 1
        %v663 = vpop.permute.xlu0 %662
        %664 = vrot.lane.b32.xlu0 %v283, 1
        %v665 = vpop.permute.xlu0 %664
        %666 = vrot.lane.b32.xlu0 %v282, 1
        %v667 = vpop.permute.xlu0 %666
        %668 = vrot.lane.b32.xlu0 %v284, 1
        %v669 = vpop.permute.xlu0 %668
        %vm670 = vcmp.lt.s32.totalorder %v656, 1
        %v671 = vsel %vm670, %v663, %v667
        %v672 = vsel %vm670, %v665, %v669
        %v673 = vsel %vm670, %v667, %v663
        %v674 = vsel %vm670, %v669, %v665
        %v675 = vsel %vm585, %v658, %v673
        %v676 = vsel %vm586, %v660, %v671
        %v677 = vsel %vm585, %v659, %v674
        %v678 = vsel %vm586, %v661, %v672
        %v679 = vsel %vm605, %v673, %v658
        %v680 = vsel %vm606, %v671, %v660
        %v681 = vsel %vm605, %v674, %v659
        %v682 = vsel %vm606, %v672, %v661
        %683 = vrot.lane.b32.xlu0 %v675, 16
        %v684 = vpop.permute.xlu0 %683
        %685 = vrot.lane.b32.xlu0 %v677, 16
        %v686 = vpop.permute.xlu0 %685
        %687 = vrot.lane.b32.xlu0 %v676, 16
        %v688 = vpop.permute.xlu0 %687
        %689 = vrot.lane.b32.xlu0 %v678, 16
        %v690 = vpop.permute.xlu0 %689
        %vm691 = vcmp.lt.s32.totalorder %v656, 16
        %v692 = vsel %vm691, %v684, %v688
        %v693 = vsel %vm691, %v686, %v690
        %v694 = vsel %vm691, %v688, %v684
        %v695 = vsel %vm691, %v690, %v686
        %696 = vrot.lane.b32.xlu0 %v675, 112
        %v697 = vpop.permute.xlu0 %696
        %698 = vrot.lane.b32.xlu0 %v677, 112
        %v699 = vpop.permute.xlu0 %698
        %700 = vrot.lane.b32.xlu0 %v676, 112
        %v701 = vpop.permute.xlu0 %700
        %702 = vrot.lane.b32.xlu0 %v678, 112
        %v703 = vpop.permute.xlu0 %702
        %vm704 = vcmp.lt.s32.totalorder %v656, 112
        %v705 = vsel %vm704, %v697, %v701
        %v706 = vsel %vm704, %v699, %v703
        %v707 = vsel %vm704, %v701, %v697
        %v708 = vsel %vm704, %v703, %v699
        %v709 = vsel %vm625, %v705, %v694
        %v710 = vsel %vm626, %v707, %v692
        %v711 = vsel %vm625, %v706, %v695
        %v712 = vsel %vm626, %v708, %v693
        %v713 = vsel %vm645, %v694, %v705
        %v714 = vsel %vm646, %v692, %v707
        %v715 = vsel %vm645, %v695, %v706
        %v716 = vsel %vm646, %v693, %v708
        %718 = vset.pattern.permute.xlu0 0
        %719 = vperm.xlu0 %718, %v563
        %v720 = vpop.permute.xlu0 %719
        %723 = vset.pattern.permute.xlu0 0
        %724 = vperm.xlu0 %723, %v564
        %v725 = vpop.permute.xlu0 %724
        %v727 = vmul.f32 %v709, %v720
        %v728 = vmul.f32 %v710, %v720
        %v729 = vmul.f32 %v711, %v725
        %v730 = vmul.f32 %v712, %v725
        %731 = vset.pattern.permute.xlu0 3
        %732 = vperm.xlu0 %731, %v563
        %v733 = vpop.permute.xlu0 %732
        %735 = vset.pattern.permute.xlu0 3
        %736 = vperm.xlu0 %735, %v564
        %v737 = vpop.permute.xlu0 %736
        %v739 = vmul.f32 %v675, %v733
        %v740 = vmul.f32 %v676, %v733
        %v741 = vmul.f32 %v677, %v737
        %v742 = vmul.f32 %v678, %v737
        %v743 = vadd.f32 %v727, %v739
        %v744 = vadd.f32 %v728, %v740
        %v745 = vadd.f32 %v729, %v741
        %v746 = vadd.f32 %v730, %v742
        %747 = vset.pattern.permute.xlu0 6
        %748 = vperm.xlu0 %747, %v563
        %v749 = vpop.permute.xlu0 %748
        %751 = vset.pattern.permute.xlu0 6
        %752 = vperm.xlu0 %751, %v564
        %v753 = vpop.permute.xlu0 %752
        %v755 = vmul.f32 %v713, %v749
        %v756 = vmul.f32 %v714, %v749
        %v757 = vmul.f32 %v715, %v753
        %v758 = vmul.f32 %v716, %v753
        %v759 = vadd.f32 %v743, %v755
        %v760 = vadd.f32 %v744, %v756
        %v761 = vadd.f32 %v745, %v757
        %v762 = vadd.f32 %v746, %v758
        %763 = vrot.lane.b32.xlu0 %v281, 16
        %v764 = vpop.permute.xlu0 %763
        %765 = vrot.lane.b32.xlu0 %v283, 16
        %v766 = vpop.permute.xlu0 %765
        %767 = vrot.lane.b32.xlu0 %v282, 16
        %v768 = vpop.permute.xlu0 %767
        %769 = vrot.lane.b32.xlu0 %v284, 16
        %v770 = vpop.permute.xlu0 %769
        %v771 = vsel %vm691, %v764, %v768
        %v772 = vsel %vm691, %v766, %v770
        %v773 = vsel %vm691, %v768, %v764
        %v774 = vsel %vm691, %v770, %v766
        %775 = vrot.lane.b32.xlu0 %v281, 112
        %v776 = vpop.permute.xlu0 %775
        %777 = vrot.lane.b32.xlu0 %v283, 112
        %v778 = vpop.permute.xlu0 %777
        %779 = vrot.lane.b32.xlu0 %v282, 112
        %v780 = vpop.permute.xlu0 %779
        %781 = vrot.lane.b32.xlu0 %v284, 112
        %v782 = vpop.permute.xlu0 %781
        %v783 = vsel %vm704, %v776, %v780
        %v784 = vsel %vm704, %v778, %v782
        %v785 = vsel %vm704, %v780, %v776
        %v786 = vsel %vm704, %v782, %v778
        %v787 = vsel %vm625, %v783, %v773
        %v788 = vsel %vm626, %v785, %v771
        %v789 = vsel %vm625, %v784, %v774
        %v790 = vsel %vm626, %v786, %v772
        %v791 = vsel %vm645, %v773, %v783
        %v792 = vsel %vm646, %v771, %v785
        %v793 = vsel %vm645, %v774, %v784
        %v794 = vsel %vm646, %v772, %v786
        %795 = vset.pattern.permute.xlu0 1
        %796 = vperm.xlu0 %795, %v563
        %v797 = vpop.permute.xlu0 %796
        %799 = vset.pattern.permute.xlu0 1
        %800 = vperm.xlu0 %799, %v564
        %v801 = vpop.permute.xlu0 %800
        %v803 = vmul.f32 %v787, %v797
        %v804 = vmul.f32 %v788, %v797
        %v805 = vmul.f32 %v789, %v801
        %v806 = vmul.f32 %v790, %v801
        %v807 = vadd.f32 %v759, %v803
        %v808 = vadd.f32 %v760, %v804
        %v809 = vadd.f32 %v761, %v805
        %v810 = vadd.f32 %v762, %v806
        %811 = vset.pattern.permute.xlu0 4
        %812 = vperm.xlu0 %811, %v563
        %v813 = vpop.permute.xlu0 %812
        %815 = vset.pattern.permute.xlu0 4
        %816 = vperm.xlu0 %815, %v564
        %v817 = vpop.permute.xlu0 %816
        %v819 = vmul.f32 %v281, %v813
        %v820 = vmul.f32 %v282, %v813
        %v821 = vmul.f32 %v283, %v817
        %v822 = vmul.f32 %v284, %v817
        %v823 = vadd.f32 %v807, %v819
        %v824 = vadd.f32 %v808, %v820
        %v825 = vadd.f32 %v809, %v821
        %v826 = vadd.f32 %v810, %v822
        %827 = vset.pattern.permute.xlu0 7
        %828 = vperm.xlu0 %827, %v563
        %v829 = vpop.permute.xlu0 %828
        %831 = vset.pattern.permute.xlu0 7
        %832 = vperm.xlu0 %831, %v564
        %v833 = vpop.permute.xlu0 %832
        %v835 = vmul.f32 %v791, %v829
        %v836 = vmul.f32 %v792, %v829
        %v837 = vmul.f32 %v793, %v833
        %v838 = vmul.f32 %v794, %v833
        %v839 = vadd.f32 %v823, %v835
        %v840 = vadd.f32 %v824, %v836
        %v841 = vadd.f32 %v825, %v837
        %v842 = vadd.f32 %v826, %v838
        %843 = vrot.lane.b32.xlu0 %v679, 16
        %v844 = vpop.permute.xlu0 %843
        %845 = vrot.lane.b32.xlu0 %v681, 16
        %v846 = vpop.permute.xlu0 %845
        %847 = vrot.lane.b32.xlu0 %v680, 16
        %v848 = vpop.permute.xlu0 %847
        %849 = vrot.lane.b32.xlu0 %v682, 16
        %v850 = vpop.permute.xlu0 %849
        %v851 = vsel %vm691, %v844, %v848
        %v852 = vsel %vm691, %v846, %v850
        %v853 = vsel %vm691, %v848, %v844
        %v854 = vsel %vm691, %v850, %v846
        %855 = vrot.lane.b32.xlu0 %v679, 112
        %v856 = vpop.permute.xlu0 %855
        %857 = vrot.lane.b32.xlu0 %v681, 112
        %v858 = vpop.permute.xlu0 %857
        %859 = vrot.lane.b32.xlu0 %v680, 112
        %v860 = vpop.permute.xlu0 %859
        %861 = vrot.lane.b32.xlu0 %v682, 112
        %v862 = vpop.permute.xlu0 %861
        %v863 = vsel %vm704, %v856, %v860
        %v864 = vsel %vm704, %v858, %v862
        %v865 = vsel %vm704, %v860, %v856
        %v866 = vsel %vm704, %v862, %v858
        %v867 = vsel %vm625, %v863, %v853
        %v868 = vsel %vm626, %v865, %v851
        %v869 = vsel %vm625, %v864, %v854
        %v870 = vsel %vm626, %v866, %v852
        %v871 = vsel %vm645, %v853, %v863
        %v872 = vsel %vm646, %v851, %v865
        %v873 = vsel %vm645, %v854, %v864
        %v874 = vsel %vm646, %v852, %v866
        %875 = vset.pattern.permute.xlu0 2
        %876 = vperm.xlu0 %875, %v563
        %v877 = vpop.permute.xlu0 %876
        %879 = vset.pattern.permute.xlu0 2
        %880 = vperm.xlu0 %879, %v564
        %v881 = vpop.permute.xlu0 %880
        %v883 = vmul.f32 %v867, %v877
        %v884 = vmul.f32 %v868, %v877
        %v885 = vmul.f32 %v869, %v881
        %v886 = vmul.f32 %v870, %v881
        %v887 = vadd.f32 %v839, %v883
        %v888 = vadd.f32 %v840, %v884
        %v889 = vadd.f32 %v841, %v885
        %v890 = vadd.f32 %v842, %v886
        %891 = vset.pattern.permute.xlu0 5
        %892 = vperm.xlu0 %891, %v563
        %v893 = vpop.permute.xlu0 %892
        %895 = vset.pattern.permute.xlu0 5
        %896 = vperm.xlu0 %895, %v564
        %v897 = vpop.permute.xlu0 %896
        %v899 = vmul.f32 %v679, %v893
        %v900 = vmul.f32 %v680, %v893
        %v901 = vmul.f32 %v681, %v897
        %v902 = vmul.f32 %v682, %v897
        %v903 = vadd.f32 %v887, %v899
        %v904 = vadd.f32 %v888, %v900
        %v905 = vadd.f32 %v889, %v901
        %v906 = vadd.f32 %v890, %v902
        %907 = vset.pattern.permute.xlu0 8
        %908 = vperm.xlu0 %907, %v563
        %v909 = vpop.permute.xlu0 %908
        %911 = vset.pattern.permute.xlu0 8
        %912 = vperm.xlu0 %911, %v564
        %v913 = vpop.permute.xlu0 %912
        %v915 = vmul.f32 %v871, %v909
        %v916 = vmul.f32 %v872, %v909
        %v917 = vmul.f32 %v873, %v913
        %v918 = vmul.f32 %v874, %v913
        %v919 = vadd.f32 %v903, %v915
        %v920 = vadd.f32 %v904, %v916
        %v921 = vadd.f32 %v905, %v917
        %v922 = vadd.f32 %v906, %v918
        %923 = vst [vmem:[%s273] sm:$0xff] %v919
        %924 = vst [vmem:[%s273 + $0x8] sm:$0xff] %v920
        %925 = vst [vmem:[%s273 + $0x10] sm:$0xff] %v921
        %926 = vst [vmem:[%s273 + $0x18] sm:$0xff] %v922
        %v927 = vsub.f32 %v281, %v919
        %v928 = vsub.f32 %v282, %v920
        %v929 = vsub.f32 %v283, %v921
        %v930 = vsub.f32 %v284, %v922
        %931 = vst [vmem:[%s280] sm:$0xff] %v927
        %932 = vst [vmem:[%s280 + $0x8] sm:$0xff] %v928
        %933 = vst [vmem:[%s280 + $0x10] sm:$0xff] %v929
        %934 = vst [vmem:[%s280 + $0x18] sm:$0xff] %v930
        %s935 = sand.u32 %s145, 1
        %s936 = scalar_lea.sflag [#allocation4], %s935
        %s937 = sand.u32 %s145, 1
        %s938 = smul.addr %s937, 32
        %s939 = scalar_lea.vmem [#allocation5], %s938
        %s940 = sand.u32 %s171, 1
        %s941 = scalar_lea.sflag [#allocation7], %s940
        %s942 = sand.u32 %s171, 1
        %s943 = smul.addr %s942, 32
        %s944 = scalar_lea.vmem [#allocation6], %s943
        // Predicated region
        $region45: #{tpu_custom_call.1} parent=39 // pred_check
          %p945 = pneg %p155
        $region46: #{tpu_custom_call.1} parent=39 // pred_check_branch
          %947 = sbr.rel (%p945) target = $region48
        $region47: #{tpu_custom_call.1} parent=39 // pred_region
          %s949 = ssub.s32 512, 512
          %950 = vsyncadd %s936, %s949
          %s951 = smul.addr %s27, 4
          %s952 = smul.addr %s951, 128
          %s953 = scalar_lea.hbm %s5, %s952
          %s954 = sshll.u32 %s939, 4
          %s955 = int_to_ptr.vmem [resolvable:$true] %s954
          %960 = dma.vmem_to_hbm [thread:$0]  %s955, 512, %s953, %s936, 256, 256, 16
        $region48: #{tpu_custom_call.1} parent=39 // pred_fallthru
          _
        // Predicated region
        $region49: #{tpu_custom_call.1} parent=39 // pred_check
          %p961 = pneg %p181
        $region50: #{tpu_custom_call.1} parent=39 // pred_check_branch
          %963 = sbr.rel (%p961) target = $region52
        $region51: #{tpu_custom_call.1} parent=39 // pred_region
          %s965 = ssub.s32 512, 512
          %966 = vsyncadd %s941, %s965
          %s967 = smul.addr %s27, 4
          %s968 = smul.addr %s967, 128
          %s969 = scalar_lea.hbm %s6, %s968
          %s970 = sshll.u32 %s944, 4
          %s971 = int_to_ptr.vmem [resolvable:$true] %s970
          %976 = dma.vmem_to_hbm [thread:$0]  %s971, 512, %s969, %s941, 256, 256, 16
        $region52: #{tpu_custom_call.1} parent=39 // pred_fallthru
          _
      $region40: #{tpu_custom_call.1} parent=5 // pred_fallthru
        _
      %p977 = scmp.le.s32.totalorder 2, %s22
      // Predicated region
      $region53: #{tpu_custom_call.1} parent=5 // pred_check
        %p978 = pneg %p977
      $region54: #{tpu_custom_call.1} parent=5 // pred_check_branch
        %980 = sbr.rel (%p978) target = $region56
      $region55: #{tpu_custom_call.1} parent=5 // pred_region
        %s981 = ssub.s32 %s22, 2
        // Predicated region
        $region57: #{tpu_custom_call.1} parent=55 // pred_check
          %p982 = pneg %p161
        $region58: #{tpu_custom_call.1} parent=55 // pred_check_branch
          %984 = sbr.rel (%p982) target = $region60
        $region59: #{tpu_custom_call.1} parent=55 // pred_region
          %s985 = sand.u32 %s146, 1
          %s986 = scalar_lea.sflag [#allocation4], %s985
          %s987 = sand.u32 %s146, 1
          %s988 = smul.addr %s987, 32
          %s989 = scalar_lea.vmem [#allocation5], %s988
          %990 = dma.done %s986, 512
        $region60: #{tpu_custom_call.1} parent=55 // pred_fallthru
          _
        // Predicated region
        $region61: #{tpu_custom_call.1} parent=55 // pred_check
          %p991 = pneg %p187
        $region62: #{tpu_custom_call.1} parent=55 // pred_check_branch
          %993 = sbr.rel (%p991) target = $region64
        $region63: #{tpu_custom_call.1} parent=55 // pred_region
          %s994 = sand.u32 %s172, 1
          %s995 = scalar_lea.sflag [#allocation7], %s994
          %s996 = sand.u32 %s172, 1
          %s997 = smul.addr %s996, 32
          %s998 = scalar_lea.vmem [#allocation6], %s997
          %999 = dma.done %s995, 512
        $region64: #{tpu_custom_call.1} parent=55 // pred_fallthru
          _
      $region56: #{tpu_custom_call.1} parent=5 // pred_fallthru
        _
    $region6: #{tpu_custom_call.1} parent=1 // loop_footer
      %s26 = sadd.s32 1, %s22
    $region7: #{tpu_custom_call.1} parent=1 // loop_footer_branch
      %21 = sbr.rel target = $region3
    $region8: #{tpu_custom_call.1} parent=1 // loop_exit
      _
    %1000 = vsyncpa [#allocation3], 1
    %s1001 = scalar_lea.sflag [#allocation3], 1
    %1002 = vsyncpa %s1001, 1
    %1003 = vsyncpa [#allocation4], 1
    %s1004 = scalar_lea.sflag [#allocation4], 1
    %1005 = vsyncpa %s1004, 1
    %1006 = vsyncpa [#allocation7], 1
    %s1007 = scalar_lea.sflag [#allocation7], 1
    %1008 = vsyncpa %s1007, 1

</llo_original>
